<compile_context>
chip_gen: v7x
topology: tpu7x:2x2x1
jax: 0.10.0
libtpu: 0.0.40
codegen_flags: <defaults>
</compile_context>

<pallas_src>
import functools

import jax
import jax.numpy as jnp
from jax import lax
from jax.experimental import pallas as pl
from jax.experimental.pallas import tpu as pltpu


def _round_up(n, m):
    return ((n + m - 1) // m) * m


def _h_dot_raw_kernel(xin_ref, g_ref, r_ref, o_ref, *, n_pass):
    """One row tile:  out = [eta | 1 | tanh(x@W1+b1)] @ [[A], [b2@Bm], [W2@Bm]]."""
    # MXU pass 1 (bf16 operands, f32 accumulate):
    #   cols [0, n_pass)        = [eta | 1]      (identity / ones pass-through)
    #   cols [n_pass, n_pass+H) = x @ W1 + b1    (b1 carried by the ones column)
    g = jnp.dot(xin_ref[...], g_ref[...], preferred_element_type=jnp.float32)

    # Column mask kept to one (1, n_mid) row; tanh only on the MLP columns
    # (zero-padded columns give tanh(0)=0 and multiply zero rows of R -> exact).
    col = lax.broadcasted_iota(jnp.int32, (1, g.shape[1]), 1)
    hh = jnp.where(col < n_pass, g, jnp.tanh(g))

    # MXU pass 2: eta@A + 1*(b2@Bm) + tanh(.)@(W2@Bm)   (bias already folded into R).
    out = jnp.dot(hh.astype(r_ref.dtype), r_ref[...],
                  preferred_element_type=jnp.float32)
    o_ref[...] = out.astype(o_ref.dtype)


def fold_params(w1, b1, w2, b2, a, bm, *, dtype=jnp.bfloat16):
    """One-time, input-independent weight folding + tile padding (exact rewrites).

    G : (k_in, n_mid)  rows = [eta | x | 1 | 0-pad],  cols = [eta-id | ones | W1-cols | 0-pad]
    R : (n_mid, d_eta) rows = [A ; b2@Bm ; W2@Bm ; 0-pad]
    """
    d_x, hidden = w1.shape
    d_eta = a.shape[0]
    b1 = jnp.reshape(b1, (1, hidden))
    b2 = jnp.reshape(b2, (1, -1))
    f32 = jnp.float32

    k_in = _round_up(d_eta + d_x + 1, 16)       # xin cols / G rows  (bf16 sublane tile)
    n_mid = _round_up(d_eta + 1 + hidden, 16)   # G cols / R rows

    g_mat = jnp.zeros((k_in, n_mid), f32)
    g_mat = g_mat.at[:d_eta, :d_eta].set(jnp.eye(d_eta, dtype=f32))
    g_mat = g_mat.at[d_eta:d_eta + d_x, d_eta + 1:d_eta + 1 + hidden].set(w1.astype(f32))
    g_mat = g_mat.at[d_eta + d_x, d_eta].set(1.0)
    g_mat = g_mat.at[d_eta + d_x, d_eta + 1:d_eta + 1 + hidden].set(b1[0].astype(f32))

    r_mat = jnp.zeros((n_mid, d_eta), f32)
    r_mat = r_mat.at[:d_eta, :].set(a.astype(f32))
    r_mat = r_mat.at[d_eta, :].set((b2.astype(f32) @ bm.astype(f32))[0])
    r_mat = r_mat.at[d_eta + 1:d_eta + 1 + hidden, :].set(w2.astype(f32) @ bm.astype(f32))

    return g_mat.astype(dtype), r_mat.astype(dtype)


@functools.partial(jax.jit, static_argnames=("block_rows",))
def auto_lirpa_raw_dynamics(eta, x, g_mat, r_mat, *, block_rows=2048):
    """eta: (B, d_eta), x: (B, d_x) -> (B, d_eta) float32."""
    batch, d_eta = eta.shape
    d_x = x.shape[1]
    k_in, n_mid = g_mat.shape
    n_out = r_mat.shape[1]

    # Row tiling: multiple of 16 (bf16 sublane tile), clamped to the (padded) batch.
    bp = _round_up(max(batch, 16), 16)
    tm = min(_round_up(block_rows, 16), bp)
    bp = _round_up(bp, tm)

    # Augmented input [eta | x | 1 | 0-pad] in bf16; fused into one producer op under jit.
    pad_cols = k_in - (d_eta + d_x + 1)
    pieces = [eta, x, jnp.ones((batch, 1), eta.dtype)]
    if pad_cols:
        pieces.append(jnp.zeros((batch, pad_cols), eta.dtype))
    xin = jnp.concatenate(pieces, axis=1).astype(g_mat.dtype)
    if bp > batch:
        xin = jnp.pad(xin, ((0, bp - batch), (0, 0)))

    kernel = functools.partial(_h_dot_raw_kernel, n_pass=d_eta + 1)
    out = pl.pallas_call(
        kernel,
        out_shape=jax.ShapeDtypeStruct((bp, n_out), jnp.float32),
        grid_spec=pl.GridSpec(
            grid=(bp // tm,),
            in_specs=[
                pl.BlockSpec((tm, k_in), lambda i: (i, 0)),      # activation tile
                pl.BlockSpec((k_in, n_mid), lambda i: (0, 0)),   # G: VMEM-resident
                pl.BlockSpec((n_mid, n_out), lambda i: (0, 0)),  # R: VMEM-resident
            ],
            out_specs=pl.BlockSpec((tm, n_out), lambda i: (i, 0)),
        ),
        compiler_params=pltpu.CompilerParams(
            dimension_semantics=("parallel",),   # shard batch across v7x's 2 TensorCores
        ),
    )(xin, g_mat, r_mat)
    return out[:batch]


def _reference_f32(eta, x, w1, b1, w2, b2, a, bm):
    theta = jnp.tanh(x @ w1 + b1) @ w2 + b2
    return eta @ a + theta @ bm


def _reference_quantized(eta, x, g_mat, r_mat):
    """Same math / same bf16-quantized operands as the kernel, in plain JAX."""
    f32 = jnp.float32
    batch = eta.shape[0]
    d_eta = r_mat.shape[1]
    k_in = g_mat.shape[0]
    pad_cols = k_in - (eta.shape[1] + x.shape[1] + 1)
    pieces = [eta, x, jnp.ones((batch, 1), f32)]
    if pad_cols:
        pieces.append(jnp.zeros((batch, pad_cols), f32))
    xin = jnp.concatenate(pieces, axis=1).astype(g_mat.dtype).astype(f32)
    g = xin @ g_mat.astype(f32)
    col = jnp.arange(g.shape[1])[None, :]
    hh = jnp.where(col < d_eta + 1, g, jnp.tanh(g))
    return hh.astype(g_mat.dtype).astype(f32) @ r_mat.astype(f32)


if __name__ == "__main__":
    key = jax.random.PRNGKey(0)
    B, D_ETA, D_X, HID, P = 2, 8, 16, 32, 4

    ks = jax.random.split(key, 8)
    eta = jax.random.normal(ks[0], (B, D_ETA), jnp.float32)
    x = jax.random.normal(ks[1], (B, D_X), jnp.float32)

    # Deterministic synthetic parameters (scaled gaussian init).
    w1 = jax.random.normal(ks[2], (D_X, HID), jnp.float32) / jnp.sqrt(D_X)
    b1 = jax.random.normal(ks[3], (1, HID), jnp.float32) * 0.1
    w2 = jax.random.normal(ks[4], (HID, P), jnp.float32) / jnp.sqrt(HID)
    b2 = jax.random.normal(ks[5], (1, P), jnp.float32) * 0.1
    a = jax.random.normal(ks[6], (D_ETA, D_ETA), jnp.float32) / jnp.sqrt(D_ETA)
    bm = jax.random.normal(ks[7], (P, D_ETA), jnp.float32) / jnp.sqrt(P)

    # One-time weight folding (input independent).
    g_mat, r_mat = fold_params(w1, b1, w2, b2, a, bm)

    # Module-sized call (B=2, grid=(1,)).
    out = jax.block_until_ready(auto_lirpa_raw_dynamics(eta, x, g_mat, r_mat))
    assert out.shape == (B, D_ETA)
    ref_q = _reference_quantized(eta, x, g_mat, r_mat)
    ref_f = _reference_f32(eta, x, w1, b1, w2, b2, a, bm)
    assert jnp.allclose(out, ref_q, atol=5e-3, rtol=5e-3), (
        f"max abs err vs quantized ref = {jnp.max(jnp.abs(out - ref_q))}")
    assert jnp.allclose(out, ref_f, atol=1.5e-1, rtol=1.5e-1), (
        f"max abs err vs f32 ref = {jnp.max(jnp.abs(out - ref_f))}")

    # Batched call: grid > 1, weights stay VMEM-resident, batch axis parallel.
    BB = 4096
    kb = jax.random.split(jax.random.PRNGKey(1), 2)
    eta_b = jax.random.normal(kb[0], (BB, D_ETA), jnp.float32)
    x_b = jax.random.normal(kb[1], (BB, D_X), jnp.float32)
    out_b = jax.block_until_ready(
        auto_lirpa_raw_dynamics(eta_b, x_b, g_mat, r_mat, block_rows=2048))
    assert out_b.shape == (BB, D_ETA)
    ref_qb = _reference_quantized(eta_b, x_b, g_mat, r_mat)
    assert jnp.allclose(out_b, ref_qb, atol=5e-3, rtol=5e-3), (
        f"max abs err vs quantized ref (batched) = {jnp.max(jnp.abs(out_b - ref_qb))}")

    print("KERNEL_OK")
</pallas_src>

<mosaic_0001>
module attributes {stable_mosaic.version = 11 : i64} {
  func.func @_h_dot_raw_kernel(%arg0: i32, %arg1: memref<16x32xbf16, #tpu.memory_space<vmem>>, %arg2: memref<32x48xbf16, #tpu.memory_space<vmem>>, %arg3: memref<48x8xbf16, #tpu.memory_space<vmem>>, %arg4: memref<16x8xf32, #tpu.memory_space<vmem>>) attributes {dimension_semantics = [#tpu.dimension_semantics<parallel>], iteration_bounds = array<i64: 1>, scalar_prefetch = 0 : i64, scratch_operands = 0 : i64, tpu.core_type = #tpu.core_type<tc>, window_params = [{transform_indices = @transform_0, window_bounds = array<i64: 16, 32>}, {pipeline_mode = #tpu.pipeline_mode<synchronous>, transform_indices = @transform_1, window_bounds = array<i64: 32, 48>}, {pipeline_mode = #tpu.pipeline_mode<synchronous>, transform_indices = @transform_2, window_bounds = array<i64: 48, 8>}, {transform_indices = @transform_3, window_bounds = array<i64: 16, 8>}]} {
    %c0 = arith.constant 0 : index
    %c0_0 = arith.constant 0 : index
    %0 = vector.load %arg1[%c0, %c0_0] : memref<16x32xbf16, #tpu.memory_space<vmem>>, vector<16x32xbf16>
    %c0_1 = arith.constant 0 : index
    %c0_2 = arith.constant 0 : index
    %1 = vector.load %arg2[%c0_1, %c0_2] : memref<32x48xbf16, #tpu.memory_space<vmem>>, vector<32x48xbf16>
    %cst = arith.constant dense<0.000000e+00> : vector<16x48xf32>
    %2 = tpu.matmul %0, %1, %cst {dimension_numbers = #tpu.dot_dimension_numbers<[1], [0], [0], [1], [0, 0, 1, 1], [], []>} : vector<16x32xbf16>, vector<32x48xbf16>, vector<16x48xf32> -> vector<16x48xf32>
    %3 = tpu.iota {dimensions = array<i32: 1>} : vector<1x48xi32>
    %c9_i32 = arith.constant 9 : i32
    %4 = vector.broadcast %c9_i32 : i32 to vector<1x48xi32>
    %5 = arith.cmpi slt, %3, %4 : vector<1x48xi32>
    %6 = math.tanh %2 : vector<16x48xf32>
    %7 = vector.shape_cast %5 : vector<1x48xi1> to vector<1x48xi1>
    %8 = vector.broadcast %7 : vector<1x48xi1> to vector<16x48xi1>
    %9 = arith.select %8, %2, %6 : vector<16x48xi1>, vector<16x48xf32>
    %10 = arith.truncf %9 : vector<16x48xf32> to vector<16x48xbf16>
    %c0_3 = arith.constant 0 : index
    %c0_4 = arith.constant 0 : index
    %11 = vector.load %arg3[%c0_3, %c0_4] : memref<48x8xbf16, #tpu.memory_space<vmem>>, vector<48x8xbf16>
    %cst_5 = arith.constant dense<0.000000e+00> : vector<16x8xf32>
    %12 = tpu.matmul %10, %11, %cst_5 {dimension_numbers = #tpu.dot_dimension_numbers<[1], [0], [0], [1], [0, 0, 1, 1], [], []>} : vector<16x48xbf16>, vector<48x8xbf16>, vector<16x8xf32> -> vector<16x8xf32>
    %c0_6 = arith.constant 0 : index
    %c0_7 = arith.constant 0 : index
    %13 = vector.load %arg4[%c0_6, %c0_7] : memref<16x8xf32, #tpu.memory_space<vmem>>, vector<16x8xf32>
    tpu.vector_store %arg4[%c0_6, %c0_7], %12 {strides = array<i32>} : memref<16x8xf32, #tpu.memory_space<vmem>>, vector<16x8xf32>,
    return
  }
  func.func @transform_0(%arg0: i32) -> (i32, i32) {
    %c0_i32 = arith.constant 0 : i32
    %c0_i32_0 = arith.constant 0 : i32
    return %arg0, %c0_i32 : i32, i32
  }
  func.func @transform_1(%arg0: i32) -> (i32, i32) {
    %c0_i32 = arith.constant 0 : i32
    %c0_i32_0 = arith.constant 0 : i32
    %c0_i32_1 = arith.constant 0 : i32
    return %c0_i32, %c0_i32_0 : i32, i32
  }
  func.func @transform_2(%arg0: i32) -> (i32, i32) {
    %c0_i32 = arith.constant 0 : i32
    %c0_i32_0 = arith.constant 0 : i32
    %c0_i32_1 = arith.constant 0 : i32
    return %c0_i32, %c0_i32_0 : i32, i32
  }
  func.func @transform_3(%arg0: i32) -> (i32, i32) {
    %c0_i32 = arith.constant 0 : i32
    %c0_i32_0 = arith.constant 0 : i32
    return %arg0, %c0_i32 : i32, i32
  }
}

</mosaic_0001>

<llo_original>
// kernel: auto_lirpa_raw_dynamics.1
$region0: #{auto_lirpa_raw_dynamics.1}
  #allocation0 [shape = 'u32[]', space=smem, size = 0x4, offset = 0x4, fixed_abs, tag = 'smem constant byte address 0x4 - core index']
  #allocation1 [shape = 'u32[144,128]{1,0:T(1,128)}', space=vmem, size = 0x12000, scoped, tag = 'internal scratch']
  %s0 = inlined_call_operand.vmem [shape: bf16[16,32], index: 0, kind: input, shape index: {}]
  %s1 = inlined_call_operand.vmem [shape: bf16[32,48], index: 1, kind: input, shape index: {}]
  %s2 = inlined_call_operand.vmem [shape: bf16[48,8], index: 2, kind: input, shape index: {}]
  %s3 = inlined_call_operand.vmem [shape: f32[16,8], index: 3, kind: output, shape index: {}]
  %s4 = sld [smem:[#allocation0]]
  $region22: #{auto_lirpa_raw_dynamics.1} parent=0
    _
  %s6 = ssub.s32 1, %s4
  %s7 = scalar_select 0, %s6, %s4
  // Predicated region
  $region2: #{auto_lirpa_raw_dynamics.1} parent=0 // pred_check
    _
  $region3: #{auto_lirpa_raw_dynamics.1} parent=0 // pred_check_branch
    %9 = sbr.rel (0) target = $region5
  $region4: #{auto_lirpa_raw_dynamics.1} parent=0 // pred_region
    _
  $region5: #{auto_lirpa_raw_dynamics.1} parent=0 // pred_fallthru
    _
  // Predicated region
  $region6: #{auto_lirpa_raw_dynamics.1} parent=0 // pred_check
    _
  $region7: #{auto_lirpa_raw_dynamics.1} parent=0 // pred_check_branch
    %11 = sbr.rel (0) target = $region9
  $region8: #{auto_lirpa_raw_dynamics.1} parent=0 // pred_region
    _
  $region9: #{auto_lirpa_raw_dynamics.1} parent=0 // pred_fallthru
    _
  // Predicated region
  $region10: #{auto_lirpa_raw_dynamics.1} parent=0 // pred_check
    _
  $region11: #{auto_lirpa_raw_dynamics.1} parent=0 // pred_check_branch
    %13 = sbr.rel (0) target = $region13
  $region12: #{auto_lirpa_raw_dynamics.1} parent=0 // pred_region
    _
  $region13: #{auto_lirpa_raw_dynamics.1} parent=0 // pred_fallthru
    _
  %v15 = vld [vmem:[%s0] sm:$0xf]
  %v16 = vld [vmem:[%s0 + $0x4] sm:$0xf]
  %v17 = vld [vmem:[%s1] sm:$0xf]
  %v18 = vld [vmem:[%s1 + $0x4] sm:$0xf]
  %v19 = vld [vmem:[%s1 + $0x8] sm:$0xf]
  %v20 = vld [vmem:[%s1 + $0xc] sm:$0xf]
  %v23 = vunpack.c.l.b16 %v15
  %v24 = vunpack.c.l.b16 %v16
  %v25 = vpack.c.b16 %v24, %v23
  %v30 = vunpack.c.l.b16 %v17
  %v31 = vunpack.c.l.b16 %v18
  %v32 = vunpack.c.l.b16 %v19
  %v33 = vunpack.c.l.b16 %v20
  %v34 = vpack.c.b16 %v31, %v30
  %v35 = vpack.c.b16 %v33, %v32
  %vm38 = vcmask 261120
  %v40 = vsel %vm38, %v25, 0
  %42 = vmatprep.subr.bf16.mxu0 0
  %43 = vmatpush1.bf16.msra.mxu0 %v34
  %44 = vmatprep.subr.bf16.mxu0 0
  %45 = vmatpush1.bf16.msra.mxu0 %v35
  %46 = vmatprep.subr.bf16.mxu0 0
  %47 = vmatpush1.bf16.msra.mxu0 0
  %48 = vmatprep.subr.bf16.mxu0 0
  %49 = vmatpush1.bf16.msra.mxu0 0
  %50 = vmatprep.subr.bf16.mxu0 0
  %51 = vmatpush1.bf16.msra.mxu0 0
  %52 = vmatprep.subr.bf16.mxu0 0
  %53 = vmatpush1.bf16.msra.mxu0 0
  %54 = vmatprep.subr.bf16.mxu0 0
  %55 = vmatpush1.bf16.msra.mxu0 0
  %56 = vmatprep.subr.bf16.mxu0 0
  %57 = vmatpush1.bf16.msra.mxu0 0
  %58 = vmatprep.subr.bf16.mxu0 0
  %59 = vmatpush1.bf16.msra.mxu0 0
  %60 = vmatprep.subr.bf16.mxu0 0
  %61 = vmatpush1.bf16.msra.mxu0 0
  %62 = vmatprep.subr.bf16.mxu0 0
  %63 = vmatpush1.bf16.msra.mxu0 0
  %64 = vmatprep.subr.bf16.mxu0 0
  %65 = vmatpush1.bf16.msra.mxu0 0
  %66 = vmatprep.subr.bf16.mxu0 0
  %67 = vmatpush1.bf16.msra.mxu0 0
  %68 = vmatprep.subr.bf16.mxu0 0
  %69 = vmatpush1.bf16.msra.mxu0 0
  %70 = vmatprep.subr.bf16.mxu0 0
  %71 = vmatpush1.bf16.msra.mxu0 0
  %72 = vmatprep.subr.bf16.mxu0 0
  %73 = vmatpush1.bf16.msra.mxu0 0
  %74 = vmatprep.mubr.bf16.mxu0 0
  %75 = vmatmul.mubr.bf16.gmra.mrb[0].mxu0 %v40
  %v76 = vpop.f32.mrb[0].mxu0
  %v77 = vadd.f32 0.0, %v76
  %v78 = vpop.f32.mrb[0].mxu0
  %v79 = vpop.f32.mrb[0].mxu0
  %v80 = vadd.f32 0.0, %v79
  %v81 = vpop.f32.mrb[0].mxu0
  %82 = vdwg.mxu0
  %v83 = vlaneseq
  %v84 = vand.u32 %v83, 127
  %vm85 = vcmp.lt.s32.totalorder %v84, 9
  %v86 = vtanh.pop %v77
  %v87 = vtanh.pop %v80
  %v88 = vsel %vm85, 1, 0
  %vm89 = vcmp.eq.s32.totalorder %v88, 1
  %v90 = vsel %vm89, %v77, %v86
  %v91 = vsel %vm89, %v80, %v87
  %v92 = vpack.c.bf16 %v91, %v90
  %v93 = vld [vmem:[%s2] sm:$0xf]
  %v94 = vld [vmem:[%s2 + $0x4] sm:$0xf]
  %v95 = vld [vmem:[%s2 + $0x8] sm:$0xf]
  %v96 = vld [vmem:[%s2 + $0xc] sm:$0xf]
  %v97 = vld [vmem:[%s2 + $0x10] sm:$0xf]
  %v98 = vld [vmem:[%s2 + $0x14] sm:$0xf]
  %v105 = vunpack.c.l.b16 %v93
  %v106 = vunpack.c.l.b16 %v94
  %v107 = vunpack.c.l.b16 %v95
  %v108 = vunpack.c.l.b16 %v96
  %v109 = vunpack.c.l.b16 %v97
  %v110 = vunpack.c.l.b16 %v98
  %v111 = vpack.c.b16 %v106, %v105
  %v112 = vpack.c.b16 %v108, %v107
  %v113 = vpack.c.b16 %v110, %v109
  %vm117 = vcmask 392192
  %v119 = vsel %vm117, %v92, 0
  %121 = vmatprep.subr.bf16.mxu0 0
  %122 = vmatpush1.bf16.msra.mxu0 %v111
  %123 = vmatprep.subr.bf16.mxu0 0
  %124 = vmatpush1.bf16.msra.mxu0 %v112
  %125 = vmatprep.subr.bf16.mxu0 0
  %126 = vmatpush1.bf16.msra.mxu0 %v113
  %127 = vmatprep.subr.bf16.mxu0 0
  %128 = vmatpush1.bf16.msra.mxu0 0
  %129 = vmatprep.subr.bf16.mxu0 0
  %130 = vmatpush1.bf16.msra.mxu0 0
  %131 = vmatprep.subr.bf16.mxu0 0
  %132 = vmatpush1.bf16.msra.mxu0 0
  %133 = vmatprep.subr.bf16.mxu0 0
  %134 = vmatpush1.bf16.msra.mxu0 0
  %135 = vmatprep.subr.bf16.mxu0 0
  %136 = vmatpush1.bf16.msra.mxu0 0
  %137 = vmatprep.subr.bf16.mxu0 0
  %138 = vmatpush1.bf16.msra.mxu0 0
  %139 = vmatprep.subr.bf16.mxu0 0
  %140 = vmatpush1.bf16.msra.mxu0 0
  %141 = vmatprep.subr.bf16.mxu0 0
  %142 = vmatpush1.bf16.msra.mxu0 0
  %143 = vmatprep.subr.bf16.mxu0 0
  %144 = vmatpush1.bf16.msra.mxu0 0
  %145 = vmatprep.subr.bf16.mxu0 0
  %146 = vmatpush1.bf16.msra.mxu0 0
  %147 = vmatprep.subr.bf16.mxu0 0
  %148 = vmatpush1.bf16.msra.mxu0 0
  %149 = vmatprep.subr.bf16.mxu0 0
  %150 = vmatpush1.bf16.msra.mxu0 0
  %151 = vmatprep.subr.bf16.mxu0 0
  %152 = vmatpush1.bf16.msra.mxu0 0
  %153 = vmatprep.mubr.bf16.mxu0 0
  %154 = vmatmul.mubr.bf16.gmra.mrb[0].mxu0 %v119
  %v155 = vpop.f32.mrb[0].mxu0
  %v156 = vadd.f32 0.0, %v155
  %v157 = vpop.f32.mrb[0].mxu0
  %v158 = vpop.f32.mrb[0].mxu0
  %v159 = vadd.f32 0.0, %v158
  %v160 = vpop.f32.mrb[0].mxu0
  %161 = vdwg.mxu0
  %vm162 = vcmask 64512
  %163 = vst.msk [vmem:[%s3] sm:$0xff] %vm162, %v156
  %164 = vst.msk [vmem:[%s3 + $0x8] sm:$0xff] %vm162, %v159
  // Predicated region
  $region14: #{auto_lirpa_raw_dynamics.1} parent=0 // pred_check
    _
  $region15: #{auto_lirpa_raw_dynamics.1} parent=0 // pred_check_branch
    %166 = sbr.rel (0) target = $region17
  $region16: #{auto_lirpa_raw_dynamics.1} parent=0 // pred_region
    _
  $region17: #{auto_lirpa_raw_dynamics.1} parent=0 // pred_fallthru
    _
  // Predicated region
  $region18: #{auto_lirpa_raw_dynamics.1} parent=0 // pred_check
    _
  $region19: #{auto_lirpa_raw_dynamics.1} parent=0 // pred_check_branch
    %168 = sbr.rel (0) target = $region21
  $region20: #{auto_lirpa_raw_dynamics.1} parent=0 // pred_region
    _
  $region21: #{auto_lirpa_raw_dynamics.1} parent=0 // pred_fallthru
    _

</llo_original>
